<compile_context>
chip_gen: v5e
topology: v5e:2x2
jax: 0.10.0
libtpu: 0.0.40
codegen_flags: <defaults>
</compile_context>

<pallas_src>
import jax
import jax.numpy as jnp
from jax.experimental import pallas as pl
from jax.experimental.pallas import tpu as pltpu


def _round_up(x, m):
    return ((x + m - 1) // m) * m


def gender_mlp_kernel(x_ref, w_ref, b_ref, o_ref):
    """x_ref: (TM, P) bf16 | w_ref: (3, P, P) bf16 | b_ref: (3, P) f32 | o_ref: (TM, P) f32."""
    x = x_ref[...]
    # Layer 1: Linear + ReLU (MXU matmul, f32 accumulate)
    h = jnp.dot(x, w_ref[0], preferred_element_type=jnp.float32) + b_ref[0:1]
    h = jnp.maximum(h, 0.0).astype(jnp.bfloat16)
    # Layer 2: Linear + ReLU
    h = jnp.dot(h, w_ref[1], preferred_element_type=jnp.float32) + b_ref[1:2]
    h = jnp.maximum(h, 0.0).astype(jnp.bfloat16)
    # Layer 3: Linear (no activation); padded lanes are exactly zero (zero weights/bias).
    o_ref[...] = jnp.dot(h, w_ref[2], preferred_element_type=jnp.float32) + b_ref[2:3]


def pack_params(params, latent_dim, gender_dim):
    """Zero-pad every layer to a common lane-dense width P and stack into 2 arrays.

    wpack: (3, P, P) bf16  -- layer i weight in wpack[i, :fin_i, :fout_i]
    bpack: (3, P)    f32   -- layer i bias   in bpack[i, :fout_i]
    Zero padding is exact: padded hidden lanes stay 0 through ReLU, padded output
    lanes stay 0 and are sliced off in the wrapper.
    """
    P = _round_up(max(latent_dim, gender_dim, 128), 128)
    dims = [(latent_dim, latent_dim // 2),
            (latent_dim // 2, latent_dim // 4),
            (latent_dim // 4, gender_dim)]
    wpack = jnp.zeros((3, P, P), jnp.bfloat16)
    bpack = jnp.zeros((3, P), jnp.float32)
    for i, (fin, fout) in enumerate(dims):
        wpack = wpack.at[i, :fin, :fout].set(params[f"w{i+1}"].astype(jnp.bfloat16))
        bpack = bpack.at[i, :fout].set(params[f"b{i+1}"].astype(jnp.float32))
    return wpack, bpack, P


def gender_classifier_forward(x, wpack, bpack, gender_dim):
    """x: (B, latent_dim) f32. Returns (B, gender_dim) f32 logits."""
    B, L = x.shape
    P = wpack.shape[-1]

    # Batch tile: 256-aligned (keeps the 2x256 MXU fully fed on v6e/v7x; 128-multiple
    # also fine for v5e's 4x128), capped at 512 so 2 pipeline buffers of the x/out
    # tiles plus the resident weight slab stay far below v7x's 64 MiB VMEM.
    TILE_M = min(512, _round_up(max(B, 1), 256))
    B_pad = _round_up(B, TILE_M)

    # Pad batch to a tile multiple and features to the packed lane-dense width;
    # cast the streamed activations to bf16 at the boundary (halves HBM bytes).
    xp = jnp.zeros((B_pad, P), jnp.bfloat16).at[:B, :L].set(x.astype(jnp.bfloat16))

    out = pl.pallas_call(
        gender_mlp_kernel,
        out_shape=jax.ShapeDtypeStruct((B_pad, P), jnp.float32),
        grid=(B_pad // TILE_M,),
        in_specs=[
            pl.BlockSpec((TILE_M, P), lambda i: (i, 0)),    # x: streamed per batch tile
            pl.BlockSpec((3, P, P), lambda i: (0, 0, 0)),   # packed weights: VMEM-resident
            pl.BlockSpec((3, P), lambda i: (0, 0)),         # packed biases: VMEM-resident
        ],
        out_specs=pl.BlockSpec((TILE_M, P), lambda i: (i, 0)),
        compiler_params=pltpu.CompilerParams(
            dimension_semantics=("parallel",)),             # shard batch across v7x's 2 TCs
    )(xp, wpack, bpack)

    return out[:B, :gender_dim]


def init_params(key, latent_dim, gender_dim):
    """PyTorch nn.Linear-style init: U(-1/sqrt(fan_in), 1/sqrt(fan_in)). Weights stored (in, out)."""
    dims = [(latent_dim, latent_dim // 2),
            (latent_dim // 2, latent_dim // 4),
            (latent_dim // 4, gender_dim)]
    params = {}
    for i, (fin, fout) in enumerate(dims, start=1):
        key, kw, kb = jax.random.split(key, 3)
        bound = 1.0 / jnp.sqrt(jnp.float32(fin))
        params[f"w{i}"] = jax.random.uniform(kw, (fin, fout), jnp.float32, -bound, bound)
        params[f"b{i}"] = jax.random.uniform(kb, (fout,), jnp.float32, -bound, bound)
    return params


def reference_forward_f32(x, params):
    h1 = jnp.maximum(x @ params["w1"] + params["b1"], 0.0)
    h2 = jnp.maximum(h1 @ params["w2"] + params["b2"], 0.0)
    return h2 @ params["w3"] + params["b3"]


def reference_forward_mixed(x, params):
    """Same bf16-operand / f32-accumulate recipe as the kernel."""
    bf16 = jnp.bfloat16
    h = jnp.dot(x.astype(bf16), params["w1"].astype(bf16),
                preferred_element_type=jnp.float32) + params["b1"]
    h = jnp.maximum(h, 0.0).astype(bf16)
    h = jnp.dot(h, params["w2"].astype(bf16),
                preferred_element_type=jnp.float32) + params["b2"]
    h = jnp.maximum(h, 0.0).astype(bf16)
    return jnp.dot(h, params["w3"].astype(bf16),
                   preferred_element_type=jnp.float32) + params["b3"]


if __name__ == "__main__":
    latent_dim = 128
    gender_dim = 2

    key = jax.random.PRNGKey(0)
    key, kp = jax.random.split(key)
    params = init_params(kp, latent_dim, gender_dim)
    wpack, bpack, _ = pack_params(params, latent_dim, gender_dim)

    # Small batch (single grid step) plus a larger batch that exercises the
    # multi-step streamed-x / resident-weight pipeline.
    for batch in (8, 640):
        key, kx = jax.random.split(key)
        x = jax.random.normal(kx, (batch, latent_dim), dtype=jnp.float32)

        out = gender_classifier_forward(x, wpack, bpack, gender_dim)
        out = jax.block_until_ready(out)
        assert out.shape == (batch, gender_dim)

        ref_mixed = reference_forward_mixed(x, params)
        ref_f32 = reference_forward_f32(x, params)
        assert jnp.allclose(out, ref_mixed, atol=1e-2, rtol=1e-2), "mismatch vs bf16 reference"
        assert jnp.allclose(out, ref_f32, atol=5e-2, rtol=5e-2), "mismatch vs f32 reference"

    print("KERNEL_OK")
</pallas_src>

<mosaic_0001>
module attributes {stable_mosaic.version = 11 : i64} {
  func.func @gender_mlp_kernel(%arg0: i32, %arg1: memref<256x128xbf16, #tpu.memory_space<vmem>>, %arg2: memref<3x128x128xbf16, #tpu.memory_space<vmem>>, %arg3: memref<3x128xf32, #tpu.memory_space<vmem>>, %arg4: memref<256x128xf32, #tpu.memory_space<vmem>>) attributes {dimension_semantics = [#tpu.dimension_semantics<parallel>], iteration_bounds = array<i64: 1>, scalar_prefetch = 0 : i64, scratch_operands = 0 : i64, tpu.core_type = #tpu.core_type<tc>, window_params = [{transform_indices = @transform_0, window_bounds = array<i64: 256, 128>}, {pipeline_mode = #tpu.pipeline_mode<synchronous>, transform_indices = @transform_1, window_bounds = array<i64: 3, 128, 128>}, {pipeline_mode = #tpu.pipeline_mode<synchronous>, transform_indices = @transform_2, window_bounds = array<i64: 3, 128>}, {transform_indices = @transform_3, window_bounds = array<i64: 256, 128>}]} {
    %c0 = arith.constant 0 : index
    %c0_0 = arith.constant 0 : index
    %0 = vector.load %arg1[%c0, %c0_0] : memref<256x128xbf16, #tpu.memory_space<vmem>>, vector<256x128xbf16>
    %c0_1 = arith.constant 0 : index
    %c0_2 = arith.constant 0 : index
    %c0_3 = arith.constant 0 : index
    %1 = vector.load %arg2[%c0_1, %c0_2, %c0_3] : memref<3x128x128xbf16, #tpu.memory_space<vmem>>, vector<1x128x128xbf16>
    %2 = vector.shape_cast %1 : vector<1x128x128xbf16> to vector<128x128xbf16>
    %cst = arith.constant dense<0.000000e+00> : vector<256x128xf32>
    %3 = tpu.matmul %0, %2, %cst {dimension_numbers = #tpu.dot_dimension_numbers<[1], [0], [0], [1], [0, 0, 1, 1], [], []>} : vector<256x128xbf16>, vector<128x128xbf16>, vector<256x128xf32> -> vector<256x128xf32>
    %c0_4 = arith.constant 0 : index
    %c0_5 = arith.constant 0 : index
    %4 = vector.load %arg3[%c0_4, %c0_5] : memref<3x128xf32, #tpu.memory_space<vmem>>, vector<1x128xf32>
    %5 = vector.broadcast %4 : vector<1x128xf32> to vector<256x128xf32>
    %6 = arith.addf %3, %5 : vector<256x128xf32>
    %cst_6 = arith.constant 0.000000e+00 : f32
    %7 = vector.broadcast %cst_6 : f32 to vector<256x128xf32>
    %8 = arith.maximumf %6, %7 : vector<256x128xf32>
    %9 = arith.truncf %8 : vector<256x128xf32> to vector<256x128xbf16>
    %c1 = arith.constant 1 : index
    %c0_7 = arith.constant 0 : index
    %c0_8 = arith.constant 0 : index
    %10 = vector.load %arg2[%c1, %c0_7, %c0_8] : memref<3x128x128xbf16, #tpu.memory_space<vmem>>, vector<1x128x128xbf16>
    %11 = vector.shape_cast %10 : vector<1x128x128xbf16> to vector<128x128xbf16>
    %cst_9 = arith.constant dense<0.000000e+00> : vector<256x128xf32>
    %12 = tpu.matmul %9, %11, %cst_9 {dimension_numbers = #tpu.dot_dimension_numbers<[1], [0], [0], [1], [0, 0, 1, 1], [], []>} : vector<256x128xbf16>, vector<128x128xbf16>, vector<256x128xf32> -> vector<256x128xf32>
    %c1_10 = arith.constant 1 : index
    %c0_11 = arith.constant 0 : index
    %13 = vector.load %arg3[%c1_10, %c0_11] : memref<3x128xf32, #tpu.memory_space<vmem>>, vector<1x128xf32>
    %14 = vector.broadcast %13 : vector<1x128xf32> to vector<256x128xf32>
    %15 = arith.addf %12, %14 : vector<256x128xf32>
    %cst_12 = arith.constant 0.000000e+00 : f32
    %16 = vector.broadcast %cst_12 : f32 to vector<256x128xf32>
    %17 = arith.maximumf %15, %16 : vector<256x128xf32>
    %18 = arith.truncf %17 : vector<256x128xf32> to vector<256x128xbf16>
    %c2 = arith.constant 2 : index
    %c0_13 = arith.constant 0 : index
    %c0_14 = arith.constant 0 : index
    %19 = vector.load %arg2[%c2, %c0_13, %c0_14] : memref<3x128x128xbf16, #tpu.memory_space<vmem>>, vector<1x128x128xbf16>
    %20 = vector.shape_cast %19 : vector<1x128x128xbf16> to vector<128x128xbf16>
    %cst_15 = arith.constant dense<0.000000e+00> : vector<256x128xf32>
    %21 = tpu.matmul %18, %20, %cst_15 {dimension_numbers = #tpu.dot_dimension_numbers<[1], [0], [0], [1], [0, 0, 1, 1], [], []>} : vector<256x128xbf16>, vector<128x128xbf16>, vector<256x128xf32> -> vector<256x128xf32>
    %c2_16 = arith.constant 2 : index
    %c0_17 = arith.constant 0 : index
    %22 = vector.load %arg3[%c2_16, %c0_17] : memref<3x128xf32, #tpu.memory_space<vmem>>, vector<1x128xf32>
    %23 = vector.broadcast %22 : vector<1x128xf32> to vector<256x128xf32>
    %24 = arith.addf %21, %23 : vector<256x128xf32>
    %c0_18 = arith.constant 0 : index
    %c0_19 = arith.constant 0 : index
    %25 = vector.load %arg4[%c0_18, %c0_19] : memref<256x128xf32, #tpu.memory_space<vmem>>, vector<256x128xf32>
    tpu.vector_store %arg4[%c0_18, %c0_19], %24 {strides = array<i32>} : memref<256x128xf32, #tpu.memory_space<vmem>>, vector<256x128xf32>,
    return
  }
  func.func @transform_0(%arg0: i32) -> (i32, i32) {
    %c0_i32 = arith.constant 0 : i32
    %c0_i32_0 = arith.constant 0 : i32
    return %arg0, %c0_i32 : i32, i32
  }
  func.func @transform_1(%arg0: i32) -> (i32, i32, i32) {
    %c0_i32 = arith.constant 0 : i32
    %c0_i32_0 = arith.constant 0 : i32
    %c0_i32_1 = arith.constant 0 : i32
    %c0_i32_2 = arith.constant 0 : i32
    return %c0_i32, %c0_i32_0, %c0_i32_1 : i32, i32, i32
  }
  func.func @transform_2(%arg0: i32) -> (i32, i32) {
    %c0_i32 = arith.constant 0 : i32
    %c0_i32_0 = arith.constant 0 : i32
    %c0_i32_1 = arith.constant 0 : i32
    return %c0_i32, %c0_i32_0 : i32, i32
  }
  func.func @transform_3(%arg0: i32) -> (i32, i32) {
    %c0_i32 = arith.constant 0 : i32
    %c0_i32_0 = arith.constant 0 : i32
    return %arg0, %c0_i32 : i32, i32
  }
}

</mosaic_0001>

<llo_original>
// kernel: tpu_custom_call.1
$region0: #{tpu_custom_call.1}
  #allocation0 [shape = 'u32[]', space=smem, size = 0x4, offset = 0x4, fixed_abs, tag = 'smem constant byte address 0x4 - core index']
  #allocation1 [shape = 'u32[72,128]{1,0:T(1,128)}', space=vmem, size = 0x9000, scoped, tag = 'internal scratch']
  %s0 = inlined_call_operand.hbm [shape: bf16[256,128], index: 0, kind: input, shape index: {}]
  %s1 = inlined_call_operand.hbm [shape: bf16[3,128,128], index: 1, kind: input, shape index: {}]
  %s2 = inlined_call_operand.hbm [shape: f32[3,128], index: 2, kind: input, shape index: {}]
  %s3 = inlined_call_operand.hbm [shape: f32[256,128], index: 3, kind: output, shape index: {}]
  %s4 = sld [smem:[#allocation0]]
  $region34: #{tpu_custom_call.1} parent=0
    _
  %s6 = ssub.s32 1, %s4
  %s7 = scalar_select 0, %s6, %s4
  $region1: #{tpu_custom_call.1} parent=0
    #allocation2 [shape = 'u8[65536]{0}', space=vmem, size = 0x10000, scoped, tag = 'input window, operand 0, single buffered']
    #allocation3 [shape = 's32[1]{0}', space=sflag, size = 0x4, scoped, tag = 'scoped memory for tpu_custom_call.1']
    #allocation4 [shape = 's32[1]{0}', space=sflag, size = 0x4, scoped, tag = 'scoped memory for tpu_custom_call.1']
    #allocation5 [shape = 'u8[98304]{0}', space=vmem, size = 0x18000, scoped, tag = 'input window, operand 1, single buffered']
    #allocation6 [shape = 's32[1]{0}', space=sflag, size = 0x4, scoped, tag = 'scoped memory for tpu_custom_call.1']
    #allocation7 [shape = 'u8[2048]{0}', space=vmem, size = 0x800, scoped, tag = 'input window, operand 2, single buffered']
    #allocation8 [shape = 'u8[131072]{0}', space=vmem, size = 0x20000, scoped, tag = 'output window, operand 0, single buffered']
    %8 = vsyncpa [#allocation3], 0
    %9 = vsyncpa [#allocation6], 0
    %10 = vsyncpa [#allocation4], 0
    // Predicated region
    $region2: #{tpu_custom_call.1} parent=1 // pred_check
      _
    $region3: #{tpu_custom_call.1} parent=1 // pred_check_branch
      %12 = sbr.rel (0) target = $region5
    $region4: #{tpu_custom_call.1} parent=1 // pred_region
      %14 = vsyncadd [#allocation3], 0
      %s15 = sshll.u32 %s0, 4
      %s16 = int_to_ptr.hbm [resolvable:$true] %s15
      %s17 = sshll.u32 [#allocation2], 4
      %s18 = int_to_ptr.vmem [resolvable:$true] %s17
      %23 = dma.hbm_to_vmem [thread:$0]  %s16, 2048, %s18, [#allocation3], 64, 64, 4
    $region5: #{tpu_custom_call.1} parent=1 // pred_fallthru
      _
    // Predicated region
    $region6: #{tpu_custom_call.1} parent=1 // pred_check
      _
    $region7: #{tpu_custom_call.1} parent=1 // pred_check_branch
      %25 = sbr.rel (0) target = $region9
    $region8: #{tpu_custom_call.1} parent=1 // pred_region
      %27 = vsyncadd [#allocation6], 0
      %s28 = sshll.u32 %s1, 4
      %s29 = int_to_ptr.hbm [resolvable:$true] %s28
      %s30 = sshll.u32 [#allocation5], 4
      %s31 = int_to_ptr.vmem [resolvable:$true] %s30
      %36 = dma.hbm_to_vmem [thread:$0]  %s29, 3072, %s31, [#allocation6], 64, 64, 4
    $region9: #{tpu_custom_call.1} parent=1 // pred_fallthru
      _
    // Predicated region
    $region10: #{tpu_custom_call.1} parent=1 // pred_check
      _
    $region11: #{tpu_custom_call.1} parent=1 // pred_check_branch
      %38 = sbr.rel (0) target = $region13
    $region12: #{tpu_custom_call.1} parent=1 // pred_region
      %40 = vsyncadd [#allocation6], 0
      %s42 = sshll.u32 %s2, 4
      %s43 = int_to_ptr.hbm [resolvable:$true] %s42
      %s44 = sshll.u32 [#allocation7], 4
      %s45 = int_to_ptr.vmem [resolvable:$true] %s44
      %47 = dma.hbm_to_vmem [thread:$0]  %s43, 64, %s45, [#allocation6]
    $region13: #{tpu_custom_call.1} parent=1 // pred_fallthru
      _
    // Predicated region
    $region14: #{tpu_custom_call.1} parent=1 // pred_check
      _
    $region15: #{tpu_custom_call.1} parent=1 // pred_check_branch
      %49 = sbr.rel (0) target = $region17
    $region16: #{tpu_custom_call.1} parent=1 // pred_region
      %51 = dma.done [#allocation3], 2048
    $region17: #{tpu_custom_call.1} parent=1 // pred_fallthru
      _
    // Predicated region
    $region18: #{tpu_custom_call.1} parent=1 // pred_check
      _
    $region19: #{tpu_custom_call.1} parent=1 // pred_check_branch
      %53 = sbr.rel (0) target = $region21
    $region20: #{tpu_custom_call.1} parent=1 // pred_region
      %55 = dma.done [#allocation6], 3072
    $region21: #{tpu_custom_call.1} parent=1 // pred_fallthru
      _
    // Predicated region
    $region22: #{tpu_custom_call.1} parent=1 // pred_check
      _
    $region23: #{tpu_custom_call.1} parent=1 // pred_check_branch
      %57 = sbr.rel (0) target = $region25
    $region24: #{tpu_custom_call.1} parent=1 // pred_region
      %59 = dma.done [#allocation6], 64
    $region25: #{tpu_custom_call.1} parent=1 // pred_fallthru
      _
    %v60 = vld [vmem:[#allocation2] sm:$0xf]
    %v61 = vld [vmem:[#allocation2 + $0x4] sm:$0xf]
    %v62 = vld [vmem:[#allocation2 + $0x8] sm:$0xf]
    %v63 = vld [vmem:[#allocation2 + $0xc] sm:$0xf]
    %v64 = vld [vmem:[#allocation2 + $0x10] sm:$0xf]
    %v65 = vld [vmem:[#allocation2 + $0x14] sm:$0xf]
    %v66 = vld [vmem:[#allocation2 + $0x18] sm:$0xf]
    %v67 = vld [vmem:[#allocation2 + $0x1c] sm:$0xf]
    %v68 = vld [vmem:[#allocation2 + $0x20] sm:$0xf]
    %v69 = vld [vmem:[#allocation2 + $0x24] sm:$0xf]
    %v70 = vld [vmem:[#allocation2 + $0x28] sm:$0xf]
    %v71 = vld [vmem:[#allocation2 + $0x2c] sm:$0xf]
    %v72 = vld [vmem:[#allocation2 + $0x30] sm:$0xf]
    %v73 = vld [vmem:[#allocation2 + $0x34] sm:$0xf]
    %v74 = vld [vmem:[#allocation2 + $0x38] sm:$0xf]
    %v75 = vld [vmem:[#allocation2 + $0x3c] sm:$0xf]
    %v76 = vld [vmem:[#allocation2 + $0x40] sm:$0xf]
    %v77 = vld [vmem:[#allocation2 + $0x44] sm:$0xf]
    %v78 = vld [vmem:[#allocation2 + $0x48] sm:$0xf]
    %v79 = vld [vmem:[#allocation2 + $0x4c] sm:$0xf]
    %v80 = vld [vmem:[#allocation2 + $0x50] sm:$0xf]
    %v81 = vld [vmem:[#allocation2 + $0x54] sm:$0xf]
    %v82 = vld [vmem:[#allocation2 + $0x58] sm:$0xf]
    %v83 = vld [vmem:[#allocation2 + $0x5c] sm:$0xf]
    %v84 = vld [vmem:[#allocation2 + $0x60] sm:$0xf]
    %v85 = vld [vmem:[#allocation2 + $0x64] sm:$0xf]
    %v86 = vld [vmem:[#allocation2 + $0x68] sm:$0xf]
    %v87 = vld [vmem:[#allocation2 + $0x6c] sm:$0xf]
    %v88 = vld [vmem:[#allocation2 + $0x70] sm:$0xf]
    %v89 = vld [vmem:[#allocation2 + $0x74] sm:$0xf]
    %v90 = vld [vmem:[#allocation2 + $0x78] sm:$0xf]
    %v91 = vld [vmem:[#allocation2 + $0x7c] sm:$0xf]
    %v92 = vld [vmem:[#allocation5] sm:$0xf]
    %v93 = vld [vmem:[#allocation5 + $0x4] sm:$0xf]
    %v94 = vld [vmem:[#allocation5 + $0x8] sm:$0xf]
    %v95 = vld [vmem:[#allocation5 + $0xc] sm:$0xf]
    %v96 = vld [vmem:[#allocation5 + $0x10] sm:$0xf]
    %v97 = vld [vmem:[#allocation5 + $0x14] sm:$0xf]
    %v98 = vld [vmem:[#allocation5 + $0x18] sm:$0xf]
    %v99 = vld [vmem:[#allocation5 + $0x1c] sm:$0xf]
    %v100 = vld [vmem:[#allocation5 + $0x20] sm:$0xf]
    %v101 = vld [vmem:[#allocation5 + $0x24] sm:$0xf]
    %v102 = vld [vmem:[#allocation5 + $0x28] sm:$0xf]
    %v103 = vld [vmem:[#allocation5 + $0x2c] sm:$0xf]
    %v104 = vld [vmem:[#allocation5 + $0x30] sm:$0xf]
    %v105 = vld [vmem:[#allocation5 + $0x34] sm:$0xf]
    %v106 = vld [vmem:[#allocation5 + $0x38] sm:$0xf]
    %v107 = vld [vmem:[#allocation5 + $0x3c] sm:$0xf]
    %v108 = vld [vmem:[#allocation7] sm:$0x1]
    %v109 = vperm.slane %v108, 0
    %v142 = vunpack.c.l.b16 %v60
    %v143 = vunpack.c.l.b16 %v61
    %v144 = vunpack.c.l.b16 %v62
    %v145 = vunpack.c.l.b16 %v63
    %v146 = vunpack.c.l.b16 %v64
    %v147 = vunpack.c.l.b16 %v65
    %v148 = vunpack.c.l.b16 %v66
    %v149 = vunpack.c.l.b16 %v67
    %v150 = vunpack.c.l.b16 %v68
    %v151 = vunpack.c.l.b16 %v69
    %v152 = vunpack.c.l.b16 %v70
    %v153 = vunpack.c.l.b16 %v71
    %v154 = vunpack.c.l.b16 %v72
    %v155 = vunpack.c.l.b16 %v73
    %v156 = vunpack.c.l.b16 %v74
    %v157 = vunpack.c.l.b16 %v75
    %v158 = vunpack.c.l.b16 %v76
    %v159 = vunpack.c.l.b16 %v77
    %v160 = vunpack.c.l.b16 %v78
    %v161 = vunpack.c.l.b16 %v79
    %v162 = vunpack.c.l.b16 %v80
    %v163 = vunpack.c.l.b16 %v81
    %v164 = vunpack.c.l.b16 %v82
    %v165 = vunpack.c.l.b16 %v83
    %v166 = vunpack.c.l.b16 %v84
    %v167 = vunpack.c.l.b16 %v85
    %v168 = vunpack.c.l.b16 %v86
    %v169 = vunpack.c.l.b16 %v87
    %v170 = vunpack.c.l.b16 %v88
    %v171 = vunpack.c.l.b16 %v89
    %v172 = vunpack.c.l.b16 %v90
    %v173 = vunpack.c.l.b16 %v91
    %v174 = vpack.c.b16 %v143, %v142
    %v175 = vpack.c.b16 %v145, %v144
    %v176 = vpack.c.b16 %v147, %v146
    %v177 = vpack.c.b16 %v149, %v148
    %v178 = vpack.c.b16 %v151, %v150
    %v179 = vpack.c.b16 %v153, %v152
    %v180 = vpack.c.b16 %v155, %v154
    %v181 = vpack.c.b16 %v157, %v156
    %v182 = vpack.c.b16 %v159, %v158
    %v183 = vpack.c.b16 %v161, %v160
    %v184 = vpack.c.b16 %v163, %v162
    %v185 = vpack.c.b16 %v165, %v164
    %v186 = vpack.c.b16 %v167, %v166
    %v187 = vpack.c.b16 %v169, %v168
    %v188 = vpack.c.b16 %v171, %v170
    %v189 = vpack.c.b16 %v173, %v172
    %v222 = vunpack.c.l.b16 %v92
    %v223 = vunpack.c.l.b16 %v93
    %v224 = vunpack.c.l.b16 %v94
    %v225 = vunpack.c.l.b16 %v95
    %v226 = vunpack.c.l.b16 %v96
    %v227 = vunpack.c.l.b16 %v97
    %v228 = vunpack.c.l.b16 %v98
    %v229 = vunpack.c.l.b16 %v99
    %v230 = vunpack.c.l.b16 %v100
    %v231 = vunpack.c.l.b16 %v101
    %v232 = vunpack.c.l.b16 %v102
    %v233 = vunpack.c.l.b16 %v103
    %v234 = vunpack.c.l.b16 %v104
    %v235 = vunpack.c.l.b16 %v105
    %v236 = vunpack.c.l.b16 %v106
    %v237 = vunpack.c.l.b16 %v107
    %v238 = vpack.c.b16 %v223, %v222
    %v239 = vpack.c.b16 %v225, %v224
    %v240 = vpack.c.b16 %v227, %v226
    %v241 = vpack.c.b16 %v229, %v228
    %v242 = vpack.c.b16 %v231, %v230
    %v243 = vpack.c.b16 %v233, %v232
    %v244 = vpack.c.b16 %v235, %v234
    %v245 = vpack.c.b16 %v237, %v236
    %254 = vmatpush.bf16.msra.mxu0 %v245
    %255 = vmatpush.bf16.msra.mxu0 %v244
    %256 = vmatpush.bf16.msra.mxu0 %v243
    %257 = vmatpush.bf16.msra.mxu0 %v242
    %258 = vmatpush.bf16.msra.mxu0 %v241
    %259 = vmatpush.bf16.msra.mxu0 %v240
    %260 = vmatpush.bf16.msra.mxu0 %v239
    %261 = vmatpush.bf16.msra.mxu0 %v238
    %262 = vmatmul.bf16.gmra.mxu0 %v174
    %v263 = vpop.f32.mrf.mxu0
    %v264 = vadd.f32 %v109, %v263
    %v265 = vpop.f32.mrf.mxu0
    %v266 = vadd.f32 %v109, %v265
    %267 = vmatmul.bf16.gmra.mxu0 %v175
    %v268 = vpop.f32.mrf.mxu0
    %v269 = vadd.f32 %v109, %v268
    %v270 = vpop.f32.mrf.mxu0
    %v271 = vadd.f32 %v109, %v270
    %272 = vmatmul.bf16.gmra.mxu0 %v176
    %v273 = vpop.f32.mrf.mxu0
    %v274 = vadd.f32 %v109, %v273
    %v275 = vpop.f32.mrf.mxu0
    %v276 = vadd.f32 %v109, %v275
    %277 = vmatmul.bf16.gmra.mxu0 %v177
    %v278 = vpop.f32.mrf.mxu0
    %v279 = vadd.f32 %v109, %v278
    %v280 = vpop.f32.mrf.mxu0
    %v281 = vadd.f32 %v109, %v280
    %282 = vmatmul.bf16.gmra.mxu0 %v178
    %v283 = vpop.f32.mrf.mxu0
    %v284 = vadd.f32 %v109, %v283
    %v285 = vpop.f32.mrf.mxu0
    %v286 = vadd.f32 %v109, %v285
    %287 = vmatmul.bf16.gmra.mxu0 %v179
    %v288 = vpop.f32.mrf.mxu0
    %v289 = vadd.f32 %v109, %v288
    %v290 = vpop.f32.mrf.mxu0
    %v291 = vadd.f32 %v109, %v290
    %292 = vmatmul.bf16.gmra.mxu0 %v180
    %v293 = vpop.f32.mrf.mxu0
    %v294 = vadd.f32 %v109, %v293
    %v295 = vpop.f32.mrf.mxu0
    %v296 = vadd.f32 %v109, %v295
    %297 = vmatmul.bf16.gmra.mxu0 %v181
    %v298 = vpop.f32.mrf.mxu0
    %v299 = vadd.f32 %v109, %v298
    %v300 = vpop.f32.mrf.mxu0
    %v301 = vadd.f32 %v109, %v300
    %302 = vmatmul.bf16.gmra.mxu0 %v182
    %v303 = vpop.f32.mrf.mxu0
    %v304 = vadd.f32 %v109, %v303
    %v305 = vpop.f32.mrf.mxu0
    %v306 = vadd.f32 %v109, %v305
    %307 = vmatmul.bf16.gmra.mxu0 %v183
    %v308 = vpop.f32.mrf.mxu0
    %v309 = vadd.f32 %v109, %v308
    %v310 = vpop.f32.mrf.mxu0
    %v311 = vadd.f32 %v109, %v310
    %312 = vmatmul.bf16.gmra.mxu0 %v184
    %v313 = vpop.f32.mrf.mxu0
    %v314 = vadd.f32 %v109, %v313
    %v315 = vpop.f32.mrf.mxu0
    %v316 = vadd.f32 %v109, %v315
    %317 = vmatmul.bf16.gmra.mxu0 %v185
    %v318 = vpop.f32.mrf.mxu0
    %v319 = vadd.f32 %v109, %v318
    %v320 = vpop.f32.mrf.mxu0
    %v321 = vadd.f32 %v109, %v320
    %322 = vmatmul.bf16.gmra.mxu0 %v186
    %v323 = vpop.f32.mrf.mxu0
    %v324 = vadd.f32 %v109, %v323
    %v325 = vpop.f32.mrf.mxu0
    %v326 = vadd.f32 %v109, %v325
    %327 = vmatmul.bf16.gmra.mxu0 %v187
    %v328 = vpop.f32.mrf.mxu0
    %v329 = vadd.f32 %v109, %v328
    %v330 = vpop.f32.mrf.mxu0
    %v331 = vadd.f32 %v109, %v330
    %332 = vmatmul.bf16.gmra.mxu0 %v188
    %v333 = vpop.f32.mrf.mxu0
    %v334 = vadd.f32 %v109, %v333
    %v335 = vpop.f32.mrf.mxu0
    %v336 = vadd.f32 %v109, %v335
    %337 = vmatmul.bf16.gmra.mxu0 %v189
    %v338 = vpop.f32.mrf.mxu0
    %v339 = vadd.f32 %v109, %v338
    %v340 = vpop.f32.mrf.mxu0
    %v341 = vadd.f32 %v109, %v340
    %342 = vdwg.mxu0
    %v343 = vmax.f32 %v264, 0.0
    %v344 = vmax.f32 %v266, 0.0
    %v345 = vmax.f32 %v269, 0.0
    %v346 = vmax.f32 %v271, 0.0
    %v347 = vmax.f32 %v274, 0.0
    %v348 = vmax.f32 %v276, 0.0
    %v349 = vmax.f32 %v279, 0.0
    %v350 = vmax.f32 %v281, 0.0
    %v351 = vmax.f32 %v284, 0.0
    %v352 = vmax.f32 %v286, 0.0
    %v353 = vmax.f32 %v289, 0.0
    %v354 = vmax.f32 %v291, 0.0
    %v355 = vmax.f32 %v294, 0.0
    %v356 = vmax.f32 %v296, 0.0
    %v357 = vmax.f32 %v299, 0.0
    %v358 = vmax.f32 %v301, 0.0
    %v359 = vmax.f32 %v304, 0.0
    %v360 = vmax.f32 %v306, 0.0
    %v361 = vmax.f32 %v309, 0.0
    %v362 = vmax.f32 %v311, 0.0
    %v363 = vmax.f32 %v314, 0.0
    %v364 = vmax.f32 %v316, 0.0
    %v365 = vmax.f32 %v319, 0.0
    %v366 = vmax.f32 %v321, 0.0
    %v367 = vmax.f32 %v324, 0.0
    %v368 = vmax.f32 %v326, 0.0
    %v369 = vmax.f32 %v329, 0.0
    %v370 = vmax.f32 %v331, 0.0
    %v371 = vmax.f32 %v334, 0.0
    %v372 = vmax.f32 %v336, 0.0
    %v373 = vmax.f32 %v339, 0.0
    %v374 = vmax.f32 %v341, 0.0
    %v375 = vpack.c.bf16 %v344, %v343
    %v376 = vpack.c.bf16 %v346, %v345
    %v377 = vpack.c.bf16 %v348, %v347
    %v378 = vpack.c.bf16 %v350, %v349
    %v379 = vpack.c.bf16 %v352, %v351
    %v380 = vpack.c.bf16 %v354, %v353
    %v381 = vpack.c.bf16 %v356, %v355
    %v382 = vpack.c.bf16 %v358, %v357
    %v383 = vpack.c.bf16 %v360, %v359
    %v384 = vpack.c.bf16 %v362, %v361
    %v385 = vpack.c.bf16 %v364, %v363
    %v386 = vpack.c.bf16 %v366, %v365
    %v387 = vpack.c.bf16 %v368, %v367
    %v388 = vpack.c.bf16 %v370, %v369
    %v389 = vpack.c.bf16 %v372, %v371
    %v390 = vpack.c.bf16 %v374, %v373
    %s391 = scalar_lea.vmem [#allocation5], 64
    %v392 = vld [vmem:[%s391] sm:$0xf]
    %v393 = vld [vmem:[%s391 + $0x4] sm:$0xf]
    %v394 = vld [vmem:[%s391 + $0x8] sm:$0xf]
    %v395 = vld [vmem:[%s391 + $0xc] sm:$0xf]
    %v396 = vld [vmem:[%s391 + $0x10] sm:$0xf]
    %v397 = vld [vmem:[%s391 + $0x14] sm:$0xf]
    %v398 = vld [vmem:[%s391 + $0x18] sm:$0xf]
    %v399 = vld [vmem:[%s391 + $0x1c] sm:$0xf]
    %v400 = vld [vmem:[%s391 + $0x20] sm:$0xf]
    %v401 = vld [vmem:[%s391 + $0x24] sm:$0xf]
    %v402 = vld [vmem:[%s391 + $0x28] sm:$0xf]
    %v403 = vld [vmem:[%s391 + $0x2c] sm:$0xf]
    %v404 = vld [vmem:[%s391 + $0x30] sm:$0xf]
    %v405 = vld [vmem:[%s391 + $0x34] sm:$0xf]
    %v406 = vld [vmem:[%s391 + $0x38] sm:$0xf]
    %v407 = vld [vmem:[%s391 + $0x3c] sm:$0xf]
    %v408 = vld [vmem:[#allocation7 + $0x1] sm:$0x1]
    %v409 = vperm.slane %v408, 0
    %v426 = vunpack.c.l.b16 %v392
    %v427 = vunpack.c.l.b16 %v393
    %v428 = vunpack.c.l.b16 %v394
    %v429 = vunpack.c.l.b16 %v395
    %v430 = vunpack.c.l.b16 %v396
    %v431 = vunpack.c.l.b16 %v397
    %v432 = vunpack.c.l.b16 %v398
    %v433 = vunpack.c.l.b16 %v399
    %v434 = vunpack.c.l.b16 %v400
    %v435 = vunpack.c.l.b16 %v401
    %v436 = vunpack.c.l.b16 %v402
    %v437 = vunpack.c.l.b16 %v403
    %v438 = vunpack.c.l.b16 %v404
    %v439 = vunpack.c.l.b16 %v405
    %v440 = vunpack.c.l.b16 %v406
    %v441 = vunpack.c.l.b16 %v407
    %v442 = vpack.c.b16 %v427, %v426
    %v443 = vpack.c.b16 %v429, %v428
    %v444 = vpack.c.b16 %v431, %v430
    %v445 = vpack.c.b16 %v433, %v432
    %v446 = vpack.c.b16 %v435, %v434
    %v447 = vpack.c.b16 %v437, %v436
    %v448 = vpack.c.b16 %v439, %v438
    %v449 = vpack.c.b16 %v441, %v440
    %458 = vmatpush.bf16.msra.mxu0 %v449
    %459 = vmatpush.bf16.msra.mxu0 %v448
    %460 = vmatpush.bf16.msra.mxu0 %v447
    %461 = vmatpush.bf16.msra.mxu0 %v446
    %462 = vmatpush.bf16.msra.mxu0 %v445
    %463 = vmatpush.bf16.msra.mxu0 %v444
    %464 = vmatpush.bf16.msra.mxu0 %v443
    %465 = vmatpush.bf16.msra.mxu0 %v442
    %466 = vmatmul.bf16.gmra.mxu0 %v375
    %v467 = vpop.f32.mrf.mxu0
    %v468 = vadd.f32 %v409, %v467
    %v469 = vpop.f32.mrf.mxu0
    %v470 = vadd.f32 %v409, %v469
    %471 = vmatmul.bf16.gmra.mxu0 %v376
    %v472 = vpop.f32.mrf.mxu0
    %v473 = vadd.f32 %v409, %v472
    %v474 = vpop.f32.mrf.mxu0
    %v475 = vadd.f32 %v409, %v474
    %476 = vmatmul.bf16.gmra.mxu0 %v377
    %v477 = vpop.f32.mrf.mxu0
    %v478 = vadd.f32 %v409, %v477
    %v479 = vpop.f32.mrf.mxu0
    %v480 = vadd.f32 %v409, %v479
    %481 = vmatmul.bf16.gmra.mxu0 %v378
    %v482 = vpop.f32.mrf.mxu0
    %v483 = vadd.f32 %v409, %v482
    %v484 = vpop.f32.mrf.mxu0
    %v485 = vadd.f32 %v409, %v484
    %486 = vmatmul.bf16.gmra.mxu0 %v379
    %v487 = vpop.f32.mrf.mxu0
    %v488 = vadd.f32 %v409, %v487
    %v489 = vpop.f32.mrf.mxu0
    %v490 = vadd.f32 %v409, %v489
    %491 = vmatmul.bf16.gmra.mxu0 %v380
    %v492 = vpop.f32.mrf.mxu0
    %v493 = vadd.f32 %v409, %v492
    %v494 = vpop.f32.mrf.mxu0
    %v495 = vadd.f32 %v409, %v494
    %496 = vmatmul.bf16.gmra.mxu0 %v381
    %v497 = vpop.f32.mrf.mxu0
    %v498 = vadd.f32 %v409, %v497
    %v499 = vpop.f32.mrf.mxu0
    %v500 = vadd.f32 %v409, %v499
    %501 = vmatmul.bf16.gmra.mxu0 %v382
    %v502 = vpop.f32.mrf.mxu0
    %v503 = vadd.f32 %v409, %v502
    %v504 = vpop.f32.mrf.mxu0
    %v505 = vadd.f32 %v409, %v504
    %506 = vmatmul.bf16.gmra.mxu0 %v383
    %v507 = vpop.f32.mrf.mxu0
    %v508 = vadd.f32 %v409, %v507
    %v509 = vpop.f32.mrf.mxu0
    %v510 = vadd.f32 %v409, %v509
    %511 = vmatmul.bf16.gmra.mxu0 %v384
    %v512 = vpop.f32.mrf.mxu0
    %v513 = vadd.f32 %v409, %v512
    %v514 = vpop.f32.mrf.mxu0
    %v515 = vadd.f32 %v409, %v514
    %516 = vmatmul.bf16.gmra.mxu0 %v385
    %v517 = vpop.f32.mrf.mxu0
    %v518 = vadd.f32 %v409, %v517
    %v519 = vpop.f32.mrf.mxu0
    %v520 = vadd.f32 %v409, %v519
    %521 = vmatmul.bf16.gmra.mxu0 %v386
    %v522 = vpop.f32.mrf.mxu0
    %v523 = vadd.f32 %v409, %v522
    %v524 = vpop.f32.mrf.mxu0
    %v525 = vadd.f32 %v409, %v524
    %526 = vmatmul.bf16.gmra.mxu0 %v387
    %v527 = vpop.f32.mrf.mxu0
    %v528 = vadd.f32 %v409, %v527
    %v529 = vpop.f32.mrf.mxu0
    %v530 = vadd.f32 %v409, %v529
    %531 = vmatmul.bf16.gmra.mxu0 %v388
    %v532 = vpop.f32.mrf.mxu0
    %v533 = vadd.f32 %v409, %v532
    %v534 = vpop.f32.mrf.mxu0
    %v535 = vadd.f32 %v409, %v534
    %536 = vmatmul.bf16.gmra.mxu0 %v389
    %v537 = vpop.f32.mrf.mxu0
    %v538 = vadd.f32 %v409, %v537
    %v539 = vpop.f32.mrf.mxu0
    %v540 = vadd.f32 %v409, %v539
    %541 = vmatmul.bf16.gmra.mxu0 %v390
    %v542 = vpop.f32.mrf.mxu0
    %v543 = vadd.f32 %v409, %v542
    %v544 = vpop.f32.mrf.mxu0
    %v545 = vadd.f32 %v409, %v544
    %546 = vdwg.mxu0
    %v547 = vmax.f32 %v468, 0.0
    %v548 = vmax.f32 %v470, 0.0
    %v549 = vmax.f32 %v473, 0.0
    %v550 = vmax.f32 %v475, 0.0
    %v551 = vmax.f32 %v478, 0.0
    %v552 = vmax.f32 %v480, 0.0
    %v553 = vmax.f32 %v483, 0.0
    %v554 = vmax.f32 %v485, 0.0
    %v555 = vmax.f32 %v488, 0.0
    %v556 = vmax.f32 %v490, 0.0
    %v557 = vmax.f32 %v493, 0.0
    %v558 = vmax.f32 %v495, 0.0
    %v559 = vmax.f32 %v498, 0.0
    %v560 = vmax.f32 %v500, 0.0
    %v561 = vmax.f32 %v503, 0.0
    %v562 = vmax.f32 %v505, 0.0
    %v563 = vmax.f32 %v508, 0.0
    %v564 = vmax.f32 %v510, 0.0
    %v565 = vmax.f32 %v513, 0.0
    %v566 = vmax.f32 %v515, 0.0
    %v567 = vmax.f32 %v518, 0.0
    %v568 = vmax.f32 %v520, 0.0
    %v569 = vmax.f32 %v523, 0.0
    %v570 = vmax.f32 %v525, 0.0
    %v571 = vmax.f32 %v528, 0.0
    %v572 = vmax.f32 %v530, 0.0
    %v573 = vmax.f32 %v533, 0.0
    %v574 = vmax.f32 %v535, 0.0
    %v575 = vmax.f32 %v538, 0.0
    %v576 = vmax.f32 %v540, 0.0
    %v577 = vmax.f32 %v543, 0.0
    %v578 = vmax.f32 %v545, 0.0
    %v579 = vpack.c.bf16 %v548, %v547
    %v580 = vpack.c.bf16 %v550, %v549
    %v581 = vpack.c.bf16 %v552, %v551
    %v582 = vpack.c.bf16 %v554, %v553
    %v583 = vpack.c.bf16 %v556, %v555
    %v584 = vpack.c.bf16 %v558, %v557
    %v585 = vpack.c.bf16 %v560, %v559
    %v586 = vpack.c.bf16 %v562, %v561
    %v587 = vpack.c.bf16 %v564, %v563
    %v588 = vpack.c.bf16 %v566, %v565
    %v589 = vpack.c.bf16 %v568, %v567
    %v590 = vpack.c.bf16 %v570, %v569
    %v591 = vpack.c.bf16 %v572, %v571
    %v592 = vpack.c.bf16 %v574, %v573
    %v593 = vpack.c.bf16 %v576, %v575
    %v594 = vpack.c.bf16 %v578, %v577
    %s595 = scalar_lea.vmem [#allocation5], 128
    %v596 = vld [vmem:[%s595] sm:$0xf]
    %v597 = vld [vmem:[%s595 + $0x4] sm:$0xf]
    %v598 = vld [vmem:[%s595 + $0x8] sm:$0xf]
    %v599 = vld [vmem:[%s595 + $0xc] sm:$0xf]
    %v600 = vld [vmem:[%s595 + $0x10] sm:$0xf]
    %v601 = vld [vmem:[%s595 + $0x14] sm:$0xf]
    %v602 = vld [vmem:[%s595 + $0x18] sm:$0xf]
    %v603 = vld [vmem:[%s595 + $0x1c] sm:$0xf]
    %v604 = vld [vmem:[%s595 + $0x20] sm:$0xf]
    %v605 = vld [vmem:[%s595 + $0x24] sm:$0xf]
    %v606 = vld [vmem:[%s595 + $0x28] sm:$0xf]
    %v607 = vld [vmem:[%s595 + $0x2c] sm:$0xf]
    %v608 = vld [vmem:[%s595 + $0x30] sm:$0xf]
    %v609 = vld [vmem:[%s595 + $0x34] sm:$0xf]
    %v610 = vld [vmem:[%s595 + $0x38] sm:$0xf]
    %v611 = vld [vmem:[%s595 + $0x3c] sm:$0xf]
    %v612 = vld [vmem:[#allocation7 + $0x2] sm:$0x1]
    %v613 = vperm.slane %v612, 0
    %v630 = vunpack.c.l.b16 %v596
    %v631 = vunpack.c.l.b16 %v597
    %v632 = vunpack.c.l.b16 %v598
    %v633 = vunpack.c.l.b16 %v599
    %v634 = vunpack.c.l.b16 %v600
    %v635 = vunpack.c.l.b16 %v601
    %v636 = vunpack.c.l.b16 %v602
    %v637 = vunpack.c.l.b16 %v603
    %v638 = vunpack.c.l.b16 %v604
    %v639 = vunpack.c.l.b16 %v605
    %v640 = vunpack.c.l.b16 %v606
    %v641 = vunpack.c.l.b16 %v607
    %v642 = vunpack.c.l.b16 %v608
    %v643 = vunpack.c.l.b16 %v609
    %v644 = vunpack.c.l.b16 %v610
    %v645 = vunpack.c.l.b16 %v611
    %v646 = vpack.c.b16 %v631, %v630
    %v647 = vpack.c.b16 %v633, %v632
    %v648 = vpack.c.b16 %v635, %v634
    %v649 = vpack.c.b16 %v637, %v636
    %v650 = vpack.c.b16 %v639, %v638
    %v651 = vpack.c.b16 %v641, %v640
    %v652 = vpack.c.b16 %v643, %v642
    %v653 = vpack.c.b16 %v645, %v644
    %662 = vmatpush.bf16.msra.mxu0 %v653
    %663 = vmatpush.bf16.msra.mxu0 %v652
    %664 = vmatpush.bf16.msra.mxu0 %v651
    %665 = vmatpush.bf16.msra.mxu0 %v650
    %666 = vmatpush.bf16.msra.mxu0 %v649
    %667 = vmatpush.bf16.msra.mxu0 %v648
    %668 = vmatpush.bf16.msra.mxu0 %v647
    %669 = vmatpush.bf16.msra.mxu0 %v646
    %670 = vmatmul.bf16.gmra.mxu0 %v579
    %v671 = vpop.f32.mrf.mxu0
    %v672 = vadd.f32 %v613, %v671
    %v673 = vpop.f32.mrf.mxu0
    %v674 = vadd.f32 %v613, %v673
    %675 = vmatmul.bf16.gmra.mxu0 %v580
    %v676 = vpop.f32.mrf.mxu0
    %v677 = vadd.f32 %v613, %v676
    %v678 = vpop.f32.mrf.mxu0
    %v679 = vadd.f32 %v613, %v678
    %680 = vmatmul.bf16.gmra.mxu0 %v581
    %v681 = vpop.f32.mrf.mxu0
    %v682 = vadd.f32 %v613, %v681
    %v683 = vpop.f32.mrf.mxu0
    %v684 = vadd.f32 %v613, %v683
    %685 = vmatmul.bf16.gmra.mxu0 %v582
    %v686 = vpop.f32.mrf.mxu0
    %v687 = vadd.f32 %v613, %v686
    %v688 = vpop.f32.mrf.mxu0
    %v689 = vadd.f32 %v613, %v688
    %690 = vmatmul.bf16.gmra.mxu0 %v583
    %v691 = vpop.f32.mrf.mxu0
    %v692 = vadd.f32 %v613, %v691
    %v693 = vpop.f32.mrf.mxu0
    %v694 = vadd.f32 %v613, %v693
    %695 = vmatmul.bf16.gmra.mxu0 %v584
    %v696 = vpop.f32.mrf.mxu0
    %v697 = vadd.f32 %v613, %v696
    %v698 = vpop.f32.mrf.mxu0
    %v699 = vadd.f32 %v613, %v698
    %700 = vmatmul.bf16.gmra.mxu0 %v585
    %v701 = vpop.f32.mrf.mxu0
    %v702 = vadd.f32 %v613, %v701
    %v703 = vpop.f32.mrf.mxu0
    %v704 = vadd.f32 %v613, %v703
    %705 = vmatmul.bf16.gmra.mxu0 %v586
    %v706 = vpop.f32.mrf.mxu0
    %v707 = vadd.f32 %v613, %v706
    %v708 = vpop.f32.mrf.mxu0
    %v709 = vadd.f32 %v613, %v708
    %710 = vmatmul.bf16.gmra.mxu0 %v587
    %v711 = vpop.f32.mrf.mxu0
    %v712 = vadd.f32 %v613, %v711
    %v713 = vpop.f32.mrf.mxu0
    %v714 = vadd.f32 %v613, %v713
    %715 = vmatmul.bf16.gmra.mxu0 %v588
    %v716 = vpop.f32.mrf.mxu0
    %v717 = vadd.f32 %v613, %v716
    %v718 = vpop.f32.mrf.mxu0
    %v719 = vadd.f32 %v613, %v718
    %720 = vmatmul.bf16.gmra.mxu0 %v589
    %v721 = vpop.f32.mrf.mxu0
    %v722 = vadd.f32 %v613, %v721
    %v723 = vpop.f32.mrf.mxu0
    %v724 = vadd.f32 %v613, %v723
    %725 = vmatmul.bf16.gmra.mxu0 %v590
    %v726 = vpop.f32.mrf.mxu0
    %v727 = vadd.f32 %v613, %v726
    %v728 = vpop.f32.mrf.mxu0
    %v729 = vadd.f32 %v613, %v728
    %730 = vmatmul.bf16.gmra.mxu0 %v591
    %v731 = vpop.f32.mrf.mxu0
    %v732 = vadd.f32 %v613, %v731
    %v733 = vpop.f32.mrf.mxu0
    %v734 = vadd.f32 %v613, %v733
    %735 = vmatmul.bf16.gmra.mxu0 %v592
    %v736 = vpop.f32.mrf.mxu0
    %v737 = vadd.f32 %v613, %v736
    %v738 = vpop.f32.mrf.mxu0
    %v739 = vadd.f32 %v613, %v738
    %740 = vmatmul.bf16.gmra.mxu0 %v593
    %v741 = vpop.f32.mrf.mxu0
    %v742 = vadd.f32 %v613, %v741
    %v743 = vpop.f32.mrf.mxu0
    %v744 = vadd.f32 %v613, %v743
    %745 = vmatmul.bf16.gmra.mxu0 %v594
    %v746 = vpop.f32.mrf.mxu0
    %v747 = vadd.f32 %v613, %v746
    %v748 = vpop.f32.mrf.mxu0
    %v749 = vadd.f32 %v613, %v748
    %750 = vdwg.mxu0
    %751 = vst [vmem:[#allocation8] sm:$0xff] %v672
    %752 = vst [vmem:[#allocation8 + $0x8] sm:$0xff] %v674
    %753 = vst [vmem:[#allocation8 + $0x10] sm:$0xff] %v677
    %754 = vst [vmem:[#allocation8 + $0x18] sm:$0xff] %v679
    %755 = vst [vmem:[#allocation8 + $0x20] sm:$0xff] %v682
    %756 = vst [vmem:[#allocation8 + $0x28] sm:$0xff] %v684
    %757 = vst [vmem:[#allocation8 + $0x30] sm:$0xff] %v687
    %758 = vst [vmem:[#allocation8 + $0x38] sm:$0xff] %v689
    %759 = vst [vmem:[#allocation8 + $0x40] sm:$0xff] %v692
    %760 = vst [vmem:[#allocation8 + $0x48] sm:$0xff] %v694
    %761 = vst [vmem:[#allocation8 + $0x50] sm:$0xff] %v697
    %762 = vst [vmem:[#allocation8 + $0x58] sm:$0xff] %v699
    %763 = vst [vmem:[#allocation8 + $0x60] sm:$0xff] %v702
    %764 = vst [vmem:[#allocation8 + $0x68] sm:$0xff] %v704
    %765 = vst [vmem:[#allocation8 + $0x70] sm:$0xff] %v707
    %766 = vst [vmem:[#allocation8 + $0x78] sm:$0xff] %v709
    %767 = vst [vmem:[#allocation8 + $0x80] sm:$0xff] %v712
    %768 = vst [vmem:[#allocation8 + $0x88] sm:$0xff] %v714
    %769 = vst [vmem:[#allocation8 + $0x90] sm:$0xff] %v717
    %770 = vst [vmem:[#allocation8 + $0x98] sm:$0xff] %v719
    %771 = vst [vmem:[#allocation8 + $0xa0] sm:$0xff] %v722
    %772 = vst [vmem:[#allocation8 + $0xa8] sm:$0xff] %v724
    %773 = vst [vmem:[#allocation8 + $0xb0] sm:$0xff] %v727
    %774 = vst [vmem:[#allocation8 + $0xb8] sm:$0xff] %v729
    %775 = vst [vmem:[#allocation8 + $0xc0] sm:$0xff] %v732
    %776 = vst [vmem:[#allocation8 + $0xc8] sm:$0xff] %v734
    %777 = vst [vmem:[#allocation8 + $0xd0] sm:$0xff] %v737
    %778 = vst [vmem:[#allocation8 + $0xd8] sm:$0xff] %v739
    %779 = vst [vmem:[#allocation8 + $0xe0] sm:$0xff] %v742
    %780 = vst [vmem:[#allocation8 + $0xe8] sm:$0xff] %v744
    %781 = vst [vmem:[#allocation8 + $0xf0] sm:$0xff] %v747
    %782 = vst [vmem:[#allocation8 + $0xf8] sm:$0xff] %v749
    // Predicated region
    $region26: #{tpu_custom_call.1} parent=1 // pred_check
      _
    $region27: #{tpu_custom_call.1} parent=1 // pred_check_branch
      %784 = sbr.rel (0) target = $region29
    $region28: #{tpu_custom_call.1} parent=1 // pred_region
      %786 = vsyncadd [#allocation4], 0
      %s787 = sshll.u32 [#allocation8], 4
      %s788 = int_to_ptr.vmem [resolvable:$true] %s787
      %s789 = sshll.u32 %s3, 4
      %s790 = int_to_ptr.hbm [resolvable:$true] %s789
      %795 = dma.vmem_to_hbm [thread:$0]  %s788, 4096, %s790, [#allocation4], 128, 128, 8
    $region29: #{tpu_custom_call.1} parent=1 // pred_fallthru
      _
    // Predicated region
    $region30: #{tpu_custom_call.1} parent=1 // pred_check
      _
    $region31: #{tpu_custom_call.1} parent=1 // pred_check_branch
      %797 = sbr.rel (0) target = $region33
    $region32: #{tpu_custom_call.1} parent=1 // pred_region
      %799 = dma.done [#allocation4], 4096
    $region33: #{tpu_custom_call.1} parent=1 // pred_fallthru
      _
    %800 = vsyncpa [#allocation3], 1
    %801 = vsyncpa [#allocation6], 1
    %802 = vsyncpa [#allocation4], 1

</llo_original>
